<compile_context>
chip_gen: v6e
topology: v6e:2x2x1
jax: 0.10.0
libtpu: 0.0.40
codegen_flags: <defaults>
</compile_context>

<pallas_src>
import functools

import jax
import jax.numpy as jnp
from jax import lax
from jax.experimental import pallas as pl
from jax.experimental.pallas import tpu as pltpu


def _pick_images_per_step(n, hw, target_lanes=512, max_lanes=4096):
    """Fold images into a grid step until the fused matmul sees >= target lanes."""
    b = 1
    while (b < n and n % (2 * b) == 0 and b * hw < target_lanes
           and 2 * b * hw <= max_lanes):
        b *= 2
    return b


def _residual_kernel(x_ref, w3_ref, b3_ref, w1_ref, b1_ref, o_ref, *, H, W, B):
    """One batch of B images per grid step.

    x_ref : (B, C_in, L)        L = (H+2)*W + 2 : H-zero-padded, flattened, +1 halo each end
    w3_ref: (C_out, 9*C_in)     fused 3x3 taps (tap-major, C_in-minor, ky-major tap order)
    b3_ref: (C_out, 1)
    w1_ref: (C_out, C_in)
    b1_ref: (C_out, 1)
    o_ref : (B, C_out, H*W)     lane-dense output (HW on the lane axis)
    """
    HW = H * W
    C_in = x_ref.shape[1]
    BHW = B * HW

    x = x_ref[...]                                           # (B, C_in, L) in VMEM

    # Horizontal shifts on the flattened spatial axis wrap into the neighbouring row;
    # mask those output columns to zero (vertical out-of-range handled by the zero
    # rows padded in the wrapper).  HW % W == 0, so lane % W is the output column
    # even with B images folded along lanes.
    col = lax.broadcasted_iota(jnp.int32, (C_in, BHW), 1) % W
    not_left = col != 0                                      # tap kx=0 reads col w-1
    not_right = col != (W - 1)                               # tap kx=2 reads col w+1

    # Build the (9*C_in, B*HW) shifted-window slab: 9 taps stacked on the contraction
    # (sublane) axis, B images stacked on the lane axis.
    taps = []
    center = None
    for ky in range(3):
        for kx in range(3):
            start = ky * W + kx
            parts = [x[b, :, start:start + HW] for b in range(B)]
            win = parts[0] if B == 1 else jnp.concatenate(parts, axis=1)  # (C_in, B*HW)
            if kx == 0:
                win = jnp.where(not_left, win, 0.0)
            elif kx == 2:
                win = jnp.where(not_right, win, 0.0)
            if ky == 1 and kx == 1:
                center = win                                 # unshifted image, reused below
            taps.append(win)
    slab = jnp.concatenate(taps, axis=0)                     # (9*C_in, B*HW)

    # Fused 3x3 conv (+bias) as a single MXU matmul, then ReLU (inside the block).
    y = jnp.dot(w3_ref[...], slab, preferred_element_type=jnp.float32) + b3_ref[...]
    y = jnp.maximum(y, 0.0)

    # 1x1 projection of the identity path, residual add.
    y = y + jnp.dot(w1_ref[...], center,
                    preferred_element_type=jnp.float32) + b1_ref[...]

    # Per-image writeback: aligned lane slices (HW is a multiple of 128).
    for b in range(B):
        o_ref[b] = y[:, b * HW:(b + 1) * HW].astype(o_ref.dtype)


@jax.jit
def residual_add_forward(x_nchw, w3, b3, w1, b1):
    """x_nchw: (N, C_in, H, W) f32 -> ReLU(conv3x3(x)+b3) + (conv1x1(x)+b1), NCHW."""
    N, C_in, H, W = x_nchw.shape
    C_out = w3.shape[0]
    HW = H * W
    L = (H + 2) * W + 2

    # Zero row above/below, flatten spatial, one extra zero each end so every
    # 3x3 shift window [ky*W+kx, ky*W+kx+HW) is a static in-bounds slice.
    xpad = jnp.pad(x_nchw, ((0, 0), (0, 0), (1, 1), (0, 0)))
    xflat = jnp.pad(xpad.reshape(N, C_in, (H + 2) * W), ((0, 0), (0, 0), (1, 1)))

    # PyTorch conv weights (C_out, C_in, kH, kW), cross-correlation.
    # Fused 3x3 weight layout (C_out, 9*C_in): row index (ky*3+kx)*C_in + c,
    # matching the slab build order in the kernel.
    w3f = jnp.transpose(w3, (0, 2, 3, 1)).reshape(C_out, 9 * C_in)
    w1mat = w1.reshape(C_out, C_in)
    b3c = b3.reshape(C_out, 1)
    b1c = b1.reshape(C_out, 1)

    B = _pick_images_per_step(N, HW)
    steps = N // B

    kernel = functools.partial(_residual_kernel, H=H, W=W, B=B)
    out = pl.pallas_call(
        kernel,
        out_shape=jax.ShapeDtypeStruct((N, C_out, HW), x_nchw.dtype),
        grid_spec=pltpu.PrefetchScalarGridSpec(
            num_scalar_prefetch=0,
            grid=(steps,),
            in_specs=[
                pl.BlockSpec((B, C_in, L), lambda g: (g, 0, 0)),
                pl.BlockSpec((C_out, 9 * C_in), lambda g: (0, 0)),
                pl.BlockSpec((C_out, 1), lambda g: (0, 0)),
                pl.BlockSpec((C_out, C_in), lambda g: (0, 0)),
                pl.BlockSpec((C_out, 1), lambda g: (0, 0)),
            ],
            out_specs=pl.BlockSpec((B, C_out, HW), lambda g: (g, 0, 0)),
        ),
        compiler_params=pltpu.CompilerParams(
            dimension_semantics=("parallel",)),
    )(xflat, w3f, b3c, w1mat, b1c)

    # (N, C_out, HW) is already NCHW-ordered: free reshape, no transpose.
    return out.reshape(N, C_out, H, W)


def _reference(x, w3, b3, w1, b1):
    out = lax.conv_general_dilated(x, w3, (1, 1), ((1, 1), (1, 1)),
                                   dimension_numbers=("NCHW", "OIHW", "NCHW"))
    out = jnp.maximum(out + b3.reshape(1, -1, 1, 1), 0.0)
    iden = lax.conv_general_dilated(x, w1, (1, 1), ((0, 0), (0, 0)),
                                    dimension_numbers=("NCHW", "OIHW", "NCHW"))
    iden = iden + b1.reshape(1, -1, 1, 1)
    return out + iden


if __name__ == "__main__":
    N, C_in, C_out, H, W = 2, 4, 8, 16, 16

    key = jax.random.PRNGKey(0)
    kx, k1, k2, k3, k4 = jax.random.split(key, 5)
    x = jax.random.normal(kx, (N, C_in, H, W), jnp.float32)
    # Deterministic parameter init (module __init__ supplies shapes only).
    w3 = jax.random.normal(k1, (C_out, C_in, 3, 3), jnp.float32) * 0.1
    b3 = jax.random.normal(k2, (C_out,), jnp.float32) * 0.1
    w1 = jax.random.normal(k3, (C_out, C_in, 1, 1), jnp.float32) * 0.1
    b1 = jax.random.normal(k4, (C_out,), jnp.float32) * 0.1

    out = jax.block_until_ready(residual_add_forward(x, w3, b3, w1, b1))
    ref = jax.block_until_ready(_reference(x, w3, b3, w1, b1))

    assert out.shape == (N, C_out, H, W)
    assert jnp.allclose(out, ref, atol=1e-4, rtol=1e-4)
    print("KERNEL_OK")
</pallas_src>

<mosaic_0001>
module attributes {stable_mosaic.version = 11 : i64} {
  func.func @_residual_kernel(%arg0: i32, %arg1: memref<2x4x290xf32, #tpu.memory_space<vmem>>, %arg2: memref<8x36xf32, #tpu.memory_space<vmem>>, %arg3: memref<8x1xf32, #tpu.memory_space<vmem>>, %arg4: memref<8x4xf32, #tpu.memory_space<vmem>>, %arg5: memref<8x1xf32, #tpu.memory_space<vmem>>, %arg6: memref<2x8x256xf32, #tpu.memory_space<vmem>>) attributes {dimension_semantics = [#tpu.dimension_semantics<parallel>], iteration_bounds = array<i64: 1>, scalar_prefetch = 0 : i64, scratch_operands = 0 : i64, tpu.core_type = #tpu.core_type<tc>, window_params = [{transform_indices = @transform_0, window_bounds = array<i64: 2, 4, 290>}, {pipeline_mode = #tpu.pipeline_mode<synchronous>, transform_indices = @transform_1, window_bounds = array<i64: 8, 36>}, {pipeline_mode = #tpu.pipeline_mode<synchronous>, transform_indices = @transform_2, window_bounds = array<i64: 8, 1>}, {pipeline_mode = #tpu.pipeline_mode<synchronous>, transform_indices = @transform_3, window_bounds = array<i64: 8, 4>}, {pipeline_mode = #tpu.pipeline_mode<synchronous>, transform_indices = @transform_4, window_bounds = array<i64: 8, 1>}, {transform_indices = @transform_5, window_bounds = array<i64: 2, 8, 256>}]} {
    %c0 = arith.constant 0 : index
    %c0_0 = arith.constant 0 : index
    %c0_1 = arith.constant 0 : index
    %0 = vector.load %arg1[%c0, %c0_0, %c0_1] : memref<2x4x290xf32, #tpu.memory_space<vmem>>, vector<2x4x290xf32>
    %1 = tpu.iota {dimensions = array<i32: 1>} : vector<4x512xi32>
    %c16_i32 = arith.constant 16 : i32
    %c0_i32 = arith.constant 0 : i32
    %2 = arith.cmpi eq, %c16_i32, %c0_i32 : i32
    %c1_i32 = arith.constant 1 : i32
    %3 = arith.select %2, %c1_i32, %c16_i32 : i32
    %4 = vector.broadcast %3 : i32 to vector<4x512xi32>
    %5 = arith.remsi %1, %4 : vector<4x512xi32>
    %c0_i32_2 = arith.constant 0 : i32
    %6 = vector.broadcast %c0_i32_2 : i32 to vector<4x512xi32>
    %7 = arith.cmpi ne, %5, %6 : vector<4x512xi32>
    %c0_i32_3 = arith.constant 0 : i32
    %8 = vector.broadcast %c0_i32_3 : i32 to vector<4x512xi32>
    %9 = arith.cmpi slt, %5, %8 : vector<4x512xi32>
    %c0_i32_4 = arith.constant 0 : i32
    %10 = arith.cmpi slt, %3, %c0_i32_4 : i32
    %11 = vector.broadcast %10 : i1 to vector<4x512xi1>
    %12 = vector.broadcast %11 : vector<4x512xi1> to vector<4x512xi1>
    %13 = arith.xori %9, %12 : vector<4x512xi1>
    %14 = arith.andi %13, %7 : vector<4x512xi1>
    %15 = vector.broadcast %3 : i32 to vector<4x512xi32>
    %16 = arith.addi %5, %15 : vector<4x512xi32>
    %17 = arith.select %14, %16, %5 : vector<4x512xi1>, vector<4x512xi32>
    %c0_i32_5 = arith.constant 0 : i32
    %18 = vector.broadcast %c0_i32_5 : i32 to vector<4x512xi32>
    %19 = arith.cmpi ne, %17, %18 : vector<4x512xi32>
    %c15_i32 = arith.constant 15 : i32
    %20 = vector.broadcast %c15_i32 : i32 to vector<4x512xi32>
    %21 = arith.cmpi ne, %17, %20 : vector<4x512xi32>
    %22 = vector.extract_strided_slice %0 {offsets = [0, 0, 0], sizes = [1, 4, 256], strides = [1, 1, 1]} : vector<2x4x290xf32> to vector<1x4x256xf32>
    %23 = vector.shape_cast %22 : vector<1x4x256xf32> to vector<4x256xf32>
    %24 = vector.extract_strided_slice %0 {offsets = [1, 0, 0], sizes = [1, 4, 256], strides = [1, 1, 1]} : vector<2x4x290xf32> to vector<1x4x256xf32>
    %25 = vector.shape_cast %24 : vector<1x4x256xf32> to vector<4x256xf32>
    %26 = tpu.concatenate %23, %25 in 1 : vector<4x256xf32>, vector<4x256xf32> -> vector<4x512xf32>
    %cst = arith.constant 0.000000e+00 : f32
    %27 = vector.broadcast %cst : f32 to vector<4x512xf32>
    %28 = arith.select %19, %26, %27 : vector<4x512xi1>, vector<4x512xf32>
    %29 = vector.extract_strided_slice %0 {offsets = [0, 0, 1], sizes = [1, 4, 256], strides = [1, 1, 1]} : vector<2x4x290xf32> to vector<1x4x256xf32>
    %30 = vector.shape_cast %29 : vector<1x4x256xf32> to vector<4x256xf32>
    %31 = vector.extract_strided_slice %0 {offsets = [1, 0, 1], sizes = [1, 4, 256], strides = [1, 1, 1]} : vector<2x4x290xf32> to vector<1x4x256xf32>
    %32 = vector.shape_cast %31 : vector<1x4x256xf32> to vector<4x256xf32>
    %33 = tpu.concatenate %30, %32 in 1 : vector<4x256xf32>, vector<4x256xf32> -> vector<4x512xf32>
    %34 = vector.extract_strided_slice %0 {offsets = [0, 0, 2], sizes = [1, 4, 256], strides = [1, 1, 1]} : vector<2x4x290xf32> to vector<1x4x256xf32>
    %35 = vector.shape_cast %34 : vector<1x4x256xf32> to vector<4x256xf32>
    %36 = vector.extract_strided_slice %0 {offsets = [1, 0, 2], sizes = [1, 4, 256], strides = [1, 1, 1]} : vector<2x4x290xf32> to vector<1x4x256xf32>
    %37 = vector.shape_cast %36 : vector<1x4x256xf32> to vector<4x256xf32>
    %38 = tpu.concatenate %35, %37 in 1 : vector<4x256xf32>, vector<4x256xf32> -> vector<4x512xf32>
    %cst_6 = arith.constant 0.000000e+00 : f32
    %39 = vector.broadcast %cst_6 : f32 to vector<4x512xf32>
    %40 = arith.select %21, %38, %39 : vector<4x512xi1>, vector<4x512xf32>
    %41 = vector.extract_strided_slice %0 {offsets = [0, 0, 16], sizes = [1, 4, 256], strides = [1, 1, 1]} : vector<2x4x290xf32> to vector<1x4x256xf32>
    %42 = vector.shape_cast %41 : vector<1x4x256xf32> to vector<4x256xf32>
    %43 = vector.extract_strided_slice %0 {offsets = [1, 0, 16], sizes = [1, 4, 256], strides = [1, 1, 1]} : vector<2x4x290xf32> to vector<1x4x256xf32>
    %44 = vector.shape_cast %43 : vector<1x4x256xf32> to vector<4x256xf32>
    %45 = tpu.concatenate %42, %44 in 1 : vector<4x256xf32>, vector<4x256xf32> -> vector<4x512xf32>
    %cst_7 = arith.constant 0.000000e+00 : f32
    %46 = vector.broadcast %cst_7 : f32 to vector<4x512xf32>
    %47 = arith.select %19, %45, %46 : vector<4x512xi1>, vector<4x512xf32>
    %48 = vector.extract_strided_slice %0 {offsets = [0, 0, 17], sizes = [1, 4, 256], strides = [1, 1, 1]} : vector<2x4x290xf32> to vector<1x4x256xf32>
    %49 = vector.shape_cast %48 : vector<1x4x256xf32> to vector<4x256xf32>
    %50 = vector.extract_strided_slice %0 {offsets = [1, 0, 17], sizes = [1, 4, 256], strides = [1, 1, 1]} : vector<2x4x290xf32> to vector<1x4x256xf32>
    %51 = vector.shape_cast %50 : vector<1x4x256xf32> to vector<4x256xf32>
    %52 = tpu.concatenate %49, %51 in 1 : vector<4x256xf32>, vector<4x256xf32> -> vector<4x512xf32>
    %53 = vector.extract_strided_slice %0 {offsets = [0, 0, 18], sizes = [1, 4, 256], strides = [1, 1, 1]} : vector<2x4x290xf32> to vector<1x4x256xf32>
    %54 = vector.shape_cast %53 : vector<1x4x256xf32> to vector<4x256xf32>
    %55 = vector.extract_strided_slice %0 {offsets = [1, 0, 18], sizes = [1, 4, 256], strides = [1, 1, 1]} : vector<2x4x290xf32> to vector<1x4x256xf32>
    %56 = vector.shape_cast %55 : vector<1x4x256xf32> to vector<4x256xf32>
    %57 = tpu.concatenate %54, %56 in 1 : vector<4x256xf32>, vector<4x256xf32> -> vector<4x512xf32>
    %cst_8 = arith.constant 0.000000e+00 : f32
    %58 = vector.broadcast %cst_8 : f32 to vector<4x512xf32>
    %59 = arith.select %21, %57, %58 : vector<4x512xi1>, vector<4x512xf32>
    %60 = vector.extract_strided_slice %0 {offsets = [0, 0, 32], sizes = [1, 4, 256], strides = [1, 1, 1]} : vector<2x4x290xf32> to vector<1x4x256xf32>
    %61 = vector.shape_cast %60 : vector<1x4x256xf32> to vector<4x256xf32>
    %62 = vector.extract_strided_slice %0 {offsets = [1, 0, 32], sizes = [1, 4, 256], strides = [1, 1, 1]} : vector<2x4x290xf32> to vector<1x4x256xf32>
    %63 = vector.shape_cast %62 : vector<1x4x256xf32> to vector<4x256xf32>
    %64 = tpu.concatenate %61, %63 in 1 : vector<4x256xf32>, vector<4x256xf32> -> vector<4x512xf32>
    %cst_9 = arith.constant 0.000000e+00 : f32
    %65 = vector.broadcast %cst_9 : f32 to vector<4x512xf32>
    %66 = arith.select %19, %64, %65 : vector<4x512xi1>, vector<4x512xf32>
    %67 = vector.extract_strided_slice %0 {offsets = [0, 0, 33], sizes = [1, 4, 256], strides = [1, 1, 1]} : vector<2x4x290xf32> to vector<1x4x256xf32>
    %68 = vector.shape_cast %67 : vector<1x4x256xf32> to vector<4x256xf32>
    %69 = vector.extract_strided_slice %0 {offsets = [1, 0, 33], sizes = [1, 4, 256], strides = [1, 1, 1]} : vector<2x4x290xf32> to vector<1x4x256xf32>
    %70 = vector.shape_cast %69 : vector<1x4x256xf32> to vector<4x256xf32>
    %71 = tpu.concatenate %68, %70 in 1 : vector<4x256xf32>, vector<4x256xf32> -> vector<4x512xf32>
    %72 = vector.extract_strided_slice %0 {offsets = [0, 0, 34], sizes = [1, 4, 256], strides = [1, 1, 1]} : vector<2x4x290xf32> to vector<1x4x256xf32>
    %73 = vector.shape_cast %72 : vector<1x4x256xf32> to vector<4x256xf32>
    %74 = vector.extract_strided_slice %0 {offsets = [1, 0, 34], sizes = [1, 4, 256], strides = [1, 1, 1]} : vector<2x4x290xf32> to vector<1x4x256xf32>
    %75 = vector.shape_cast %74 : vector<1x4x256xf32> to vector<4x256xf32>
    %76 = tpu.concatenate %73, %75 in 1 : vector<4x256xf32>, vector<4x256xf32> -> vector<4x512xf32>
    %cst_10 = arith.constant 0.000000e+00 : f32
    %77 = vector.broadcast %cst_10 : f32 to vector<4x512xf32>
    %78 = arith.select %21, %76, %77 : vector<4x512xi1>, vector<4x512xf32>
    %79 = tpu.concatenate %28, %33, %40, %47, %52, %59, %66, %71, %78 in 0 : vector<4x512xf32>, vector<4x512xf32>, vector<4x512xf32>, vector<4x512xf32>, vector<4x512xf32>, vector<4x512xf32>, vector<4x512xf32>, vector<4x512xf32>, vector<4x512xf32> -> vector<36x512xf32>
    %c0_11 = arith.constant 0 : index
    %c0_12 = arith.constant 0 : index
    %80 = vector.load %arg2[%c0_11, %c0_12] : memref<8x36xf32, #tpu.memory_space<vmem>>, vector<8x36xf32>
    %cst_13 = arith.constant dense<0.000000e+00> : vector<8x512xf32>
    %81 = tpu.matmul %80, %79, %cst_13 {dimension_numbers = #tpu.dot_dimension_numbers<[1], [0], [0], [1], [0, 0, 1, 1], [], []>} : vector<8x36xf32>, vector<36x512xf32>, vector<8x512xf32> -> vector<8x512xf32>
    %c0_14 = arith.constant 0 : index
    %c0_15 = arith.constant 0 : index
    %82 = vector.load %arg3[%c0_14, %c0_15] : memref<8x1xf32, #tpu.memory_space<vmem>>, vector<8x1xf32>
    %83 = vector.broadcast %82 : vector<8x1xf32> to vector<8x512xf32>
    %84 = arith.addf %81, %83 : vector<8x512xf32>
    %cst_16 = arith.constant 0.000000e+00 : f32
    %85 = vector.broadcast %cst_16 : f32 to vector<8x512xf32>
    %86 = arith.maximumf %84, %85 : vector<8x512xf32>
    %c0_17 = arith.constant 0 : index
    %c0_18 = arith.constant 0 : index
    %87 = vector.load %arg4[%c0_17, %c0_18] : memref<8x4xf32, #tpu.memory_space<vmem>>, vector<8x4xf32>
    %cst_19 = arith.constant dense<0.000000e+00> : vector<8x512xf32>
    %88 = tpu.matmul %87, %52, %cst_19 {dimension_numbers = #tpu.dot_dimension_numbers<[1], [0], [0], [1], [0, 0, 1, 1], [], []>} : vector<8x4xf32>, vector<4x512xf32>, vector<8x512xf32> -> vector<8x512xf32>
    %89 = arith.addf %86, %88 : vector<8x512xf32>
    %c0_20 = arith.constant 0 : index
    %c0_21 = arith.constant 0 : index
    %90 = vector.load %arg5[%c0_20, %c0_21] : memref<8x1xf32, #tpu.memory_space<vmem>>, vector<8x1xf32>
    %91 = vector.broadcast %90 : vector<8x1xf32> to vector<8x512xf32>
    %92 = arith.addf %89, %91 : vector<8x512xf32>
    %93 = vector.extract_strided_slice %92 {offsets = [0, 0], sizes = [8, 256], strides = [1, 1]} : vector<8x512xf32> to vector<8x256xf32>
    %c0_22 = arith.constant 0 : index
    %c0_23 = arith.constant 0 : index
    %c0_24 = arith.constant 0 : index
    %94 = vector.load %arg6[%c0_22, %c0_23, %c0_24] : memref<2x8x256xf32, #tpu.memory_space<vmem>>, vector<1x8x256xf32>
    %95 = vector.shape_cast %94 : vector<1x8x256xf32> to vector<8x256xf32>
    %96 = vector.shape_cast %93 : vector<8x256xf32> to vector<1x8x256xf32>
    tpu.vector_store %arg6[%c0_22, %c0_23, %c0_24], %96 {strides = array<i32>} : memref<2x8x256xf32, #tpu.memory_space<vmem>>, vector<1x8x256xf32>,
    %97 = vector.extract_strided_slice %92 {offsets = [0, 256], sizes = [8, 256], strides = [1, 1]} : vector<8x512xf32> to vector<8x256xf32>
    %c1 = arith.constant 1 : index
    %c0_25 = arith.constant 0 : index
    %c0_26 = arith.constant 0 : index
    %98 = vector.load %arg6[%c1, %c0_25, %c0_26] : memref<2x8x256xf32, #tpu.memory_space<vmem>>, vector<1x8x256xf32>
    %99 = vector.shape_cast %98 : vector<1x8x256xf32> to vector<8x256xf32>
    %100 = vector.shape_cast %97 : vector<8x256xf32> to vector<1x8x256xf32>
    tpu.vector_store %arg6[%c1, %c0_25, %c0_26], %100 {strides = array<i32>} : memref<2x8x256xf32, #tpu.memory_space<vmem>>, vector<1x8x256xf32>,
    return
  }
  func.func @transform_0(%arg0: i32) -> (i32, i32, i32) {
    %c0_i32 = arith.constant 0 : i32
    %c0_i32_0 = arith.constant 0 : i32
    %c0_i32_1 = arith.constant 0 : i32
    return %arg0, %c0_i32, %c0_i32_0 : i32, i32, i32
  }
  func.func @transform_1(%arg0: i32) -> (i32, i32) {
    %c0_i32 = arith.constant 0 : i32
    %c0_i32_0 = arith.constant 0 : i32
    %c0_i32_1 = arith.constant 0 : i32
    return %c0_i32, %c0_i32_0 : i32, i32
  }
  func.func @transform_2(%arg0: i32) -> (i32, i32) {
    %c0_i32 = arith.constant 0 : i32
    %c0_i32_0 = arith.constant 0 : i32
    %c0_i32_1 = arith.constant 0 : i32
    return %c0_i32, %c0_i32_0 : i32, i32
  }
  func.func @transform_3(%arg0: i32) -> (i32, i32) {
    %c0_i32 = arith.constant 0 : i32
    %c0_i32_0 = arith.constant 0 : i32
    %c0_i32_1 = arith.constant 0 : i32
    return %c0_i32, %c0_i32_0 : i32, i32
  }
  func.func @transform_4(%arg0: i32) -> (i32, i32) {
    %c0_i32 = arith.constant 0 : i32
    %c0_i32_0 = arith.constant 0 : i32
    %c0_i32_1 = arith.constant 0 : i32
    return %c0_i32, %c0_i32_0 : i32, i32
  }
  func.func @transform_5(%arg0: i32) -> (i32, i32, i32) {
    %c0_i32 = arith.constant 0 : i32
    %c0_i32_0 = arith.constant 0 : i32
    %c0_i32_1 = arith.constant 0 : i32
    return %arg0, %c0_i32, %c0_i32_0 : i32, i32, i32
  }
}

</mosaic_0001>

<llo_original>
// kernel: residual_add_forward.1
$region0: #{residual_add_forward.1}
  #allocation0 [shape = 'u32[]', space=smem, size = 0x4, offset = 0x4, fixed_abs, tag = 'smem constant byte address 0x4 - core index']
  #allocation1 [shape = 'u32[144,128]{1,0:T(1,128)}', space=vmem, size = 0x12000, scoped, tag = 'internal scratch']
  %s0 = inlined_call_operand.vmem [shape: f32[2,4,290], index: 0, kind: input, shape index: {}]
  %s1 = inlined_call_operand.vmem [shape: f32[8,36], index: 1, kind: input, shape index: {}]
  %s2 = inlined_call_operand.vmem [shape: f32[8,1], index: 2, kind: input, shape index: {}]
  %s3 = inlined_call_operand.vmem [shape: f32[8,4], index: 3, kind: input, shape index: {}]
  %s4 = inlined_call_operand.vmem [shape: f32[8,1], index: 4, kind: input, shape index: {}]
  %s5 = inlined_call_operand.vmem [shape: f32[2,8,256], index: 5, kind: output, shape index: {}]
  %s6 = sld [smem:[#allocation0]]
  $region30: #{residual_add_forward.1} parent=0
    _
  %s8 = ssub.s32 1, %s6
  %s9 = scalar_select 0, %s8, %s6
  // Predicated region
  $region2: #{residual_add_forward.1} parent=0 // pred_check
    _
  $region3: #{residual_add_forward.1} parent=0 // pred_check_branch
    %11 = sbr.rel (0) target = $region5
  $region4: #{residual_add_forward.1} parent=0 // pred_region
    _
  $region5: #{residual_add_forward.1} parent=0 // pred_fallthru
    _
  // Predicated region
  $region6: #{residual_add_forward.1} parent=0 // pred_check
    _
  $region7: #{residual_add_forward.1} parent=0 // pred_check_branch
    %13 = sbr.rel (0) target = $region9
  $region8: #{residual_add_forward.1} parent=0 // pred_region
    _
  $region9: #{residual_add_forward.1} parent=0 // pred_fallthru
    _
  // Predicated region
  $region10: #{residual_add_forward.1} parent=0 // pred_check
    _
  $region11: #{residual_add_forward.1} parent=0 // pred_check_branch
    %15 = sbr.rel (0) target = $region13
  $region12: #{residual_add_forward.1} parent=0 // pred_region
    _
  $region13: #{residual_add_forward.1} parent=0 // pred_fallthru
    _
  // Predicated region
  $region14: #{residual_add_forward.1} parent=0 // pred_check
    _
  $region15: #{residual_add_forward.1} parent=0 // pred_check_branch
    %17 = sbr.rel (0) target = $region17
  $region16: #{residual_add_forward.1} parent=0 // pred_region
    _
  $region17: #{residual_add_forward.1} parent=0 // pred_fallthru
    _
  // Predicated region
  $region18: #{residual_add_forward.1} parent=0 // pred_check
    _
  $region19: #{residual_add_forward.1} parent=0 // pred_check_branch
    %19 = sbr.rel (0) target = $region21
  $region20: #{residual_add_forward.1} parent=0 // pred_region
    _
  $region21: #{residual_add_forward.1} parent=0 // pred_fallthru
    _
  %v20 = vld [vmem:[%s0] sm:$0xff]
  %v21 = vld [vmem:[%s0 + $0x8] sm:$0xf]
  %v22 = vld [vmem:[%s0 + $0xc] sm:$0xff]
  %v23 = vld [vmem:[%s0 + $0x14] sm:$0xf]
  %v24 = vlaneseq
  %v25 = vand.u32 %v24, 127
  %v26 = vadd.s32 %v25, 128
  %v27 = vadd.s32 %v25, 256
  %v28 = vadd.s32 %v25, 384
  %vm29 = vcmp.lt.s32.totalorder %v25, 0
  %v30 = vsub.s32 0, %v25
  %v31 = vsel %vm29, %v30, %v25
  %v32 = vshrl.u32 %v31, 4
  %v33 = vand.u32 %v31, 15
  %v34 = vsub.s32 0, %v33
  %v35 = vsel %vm29, %v34, %v33
  %vm36 = vcmp.lt.s32.totalorder %v26, 0
  %v37 = vsub.s32 0, %v26
  %v38 = vsel %vm36, %v37, %v26
  %v39 = vshrl.u32 %v38, 4
  %v40 = vand.u32 %v38, 15
  %v41 = vsub.s32 0, %v40
  %v42 = vsel %vm36, %v41, %v40
  %vm43 = vcmp.lt.s32.totalorder %v27, 0
  %v44 = vsub.s32 0, %v27
  %v45 = vsel %vm43, %v44, %v27
  %v46 = vshrl.u32 %v45, 4
  %v47 = vand.u32 %v45, 15
  %v48 = vsub.s32 0, %v47
  %v49 = vsel %vm43, %v48, %v47
  %vm50 = vcmp.lt.s32.totalorder %v28, 0
  %v51 = vsub.s32 0, %v28
  %v52 = vsel %vm50, %v51, %v28
  %v53 = vshrl.u32 %v52, 4
  %v54 = vand.u32 %v52, 15
  %v55 = vsub.s32 0, %v54
  %v56 = vsel %vm50, %v55, %v54
  %vm57 = vcmp.ne.s32.totalorder %v35, 0
  %vm58 = vcmp.ne.s32.totalorder %v42, 0
  %vm59 = vcmp.ne.s32.totalorder %v49, 0
  %vm60 = vcmp.ne.s32.totalorder %v56, 0
  %vm61 = vcmp.lt.s32.totalorder %v35, 0
  %vm62 = vcmp.lt.s32.totalorder %v42, 0
  %vm63 = vcmp.lt.s32.totalorder %v49, 0
  %vm64 = vcmp.lt.s32.totalorder %v56, 0
  %vm65 = vmand %vm61, %vm57
  %vm66 = vmand %vm62, %vm58
  %vm67 = vmand %vm63, %vm59
  %vm68 = vmand %vm64, %vm60
  %v69 = vadd.s32 %v35, 16
  %v70 = vadd.s32 %v42, 16
  %v71 = vadd.s32 %v49, 16
  %v72 = vadd.s32 %v56, 16
  %v73 = vsel %vm65, %v69, %v35
  %v74 = vsel %vm66, %v70, %v42
  %v75 = vsel %vm67, %v71, %v49
  %v76 = vsel %vm68, %v72, %v56
  %vm77 = vcmp.ne.s32.totalorder %v73, 0
  %vm78 = vcmp.ne.s32.totalorder %v74, 0
  %vm79 = vcmp.ne.s32.totalorder %v75, 0
  %vm80 = vcmp.ne.s32.totalorder %v76, 0
  %vm81 = vcmp.ne.s32.totalorder %v73, 15
  %vm82 = vcmp.ne.s32.totalorder %v74, 15
  %vm83 = vcmp.ne.s32.totalorder %v75, 15
  %vm84 = vcmp.ne.s32.totalorder %v76, 15
  %v86 = vcombine.high %v20, %v20
  %v89 = vcombine.high %v22, %v22
  %v91 = vsel %vm77, %v20, 0.0
  %v92 = vsel %vm78, %v86, 0.0
  %v93 = vsel %vm79, %v22, 0.0
  %v94 = vsel %vm80, %v89, 0.0
  %96 = vrot.lane.b32.xlu0 %v20, 127
  %v97 = vpop.permute.xlu0 %96
  %98 = vrot.lane.b32.xlu0 %v86, 127
  %v99 = vpop.permute.xlu0 %98
  %100 = vrot.lane.b32.xlu0 %v21, 127
  %v101 = vpop.permute.xlu0 %100
  %vm102 = vcmask 1039360
  %v103 = vsel %vm102, %v97, %v99
  %v104 = vsel %vm102, %v99, %v101
  %106 = vrot.lane.b32.xlu0 %v22, 127
  %v107 = vpop.permute.xlu0 %106
  %108 = vrot.lane.b32.xlu0 %v89, 127
  %v109 = vpop.permute.xlu0 %108
  %110 = vrot.lane.b32.xlu0 %v23, 127
  %v111 = vpop.permute.xlu0 %110
  %v112 = vsel %vm102, %v107, %v109
  %v113 = vsel %vm102, %v109, %v111
  %114 = vrot.lane.b32.xlu0 %v20, 126
  %v115 = vpop.permute.xlu0 %114
  %116 = vrot.lane.b32.xlu0 %v86, 126
  %v117 = vpop.permute.xlu0 %116
  %118 = vrot.lane.b32.xlu0 %v21, 126
  %v119 = vpop.permute.xlu0 %118
  %vm120 = vcmask 1031168
  %v121 = vsel %vm120, %v115, %v117
  %v122 = vsel %vm120, %v117, %v119
  %125 = vrot.lane.b32.xlu0 %v22, 126
  %v126 = vpop.permute.xlu0 %125
  %127 = vrot.lane.b32.xlu0 %v89, 126
  %v128 = vpop.permute.xlu0 %127
  %129 = vrot.lane.b32.xlu0 %v23, 126
  %v130 = vpop.permute.xlu0 %129
  %v131 = vsel %vm120, %v126, %v128
  %v132 = vsel %vm120, %v128, %v130
  %v135 = vsel %vm81, %v121, 0.0
  %v136 = vsel %vm82, %v122, 0.0
  %v137 = vsel %vm83, %v131, 0.0
  %v138 = vsel %vm84, %v132, 0.0
  %139 = vrot.lane.b32.xlu0 %v20, 112
  %v140 = vpop.permute.xlu0 %139
  %141 = vrot.lane.b32.xlu0 %v86, 112
  %v142 = vpop.permute.xlu0 %141
  %143 = vrot.lane.b32.xlu0 %v21, 112
  %v144 = vpop.permute.xlu0 %143
  %vm145 = vcmask 916480
  %v146 = vsel %vm145, %v140, %v142
  %v147 = vsel %vm145, %v142, %v144
  %150 = vrot.lane.b32.xlu0 %v22, 112
  %v151 = vpop.permute.xlu0 %150
  %152 = vrot.lane.b32.xlu0 %v89, 112
  %v153 = vpop.permute.xlu0 %152
  %154 = vrot.lane.b32.xlu0 %v23, 112
  %v155 = vpop.permute.xlu0 %154
  %v156 = vsel %vm145, %v151, %v153
  %v157 = vsel %vm145, %v153, %v155
  %v160 = vsel %vm77, %v146, 0.0
  %v161 = vsel %vm78, %v147, 0.0
  %v162 = vsel %vm79, %v156, 0.0
  %v163 = vsel %vm80, %v157, 0.0
  %164 = vrot.lane.b32.xlu0 %v20, 111
  %v165 = vpop.permute.xlu0 %164
  %166 = vrot.lane.b32.xlu0 %v86, 111
  %v167 = vpop.permute.xlu0 %166
  %168 = vrot.lane.b32.xlu0 %v21, 111
  %v169 = vpop.permute.xlu0 %168
  %vm170 = vcmask 908288
  %v171 = vsel %vm170, %v165, %v167
  %v172 = vsel %vm170, %v167, %v169
  %175 = vrot.lane.b32.xlu0 %v22, 111
  %v176 = vpop.permute.xlu0 %175
  %177 = vrot.lane.b32.xlu0 %v89, 111
  %v178 = vpop.permute.xlu0 %177
  %179 = vrot.lane.b32.xlu0 %v23, 111
  %v180 = vpop.permute.xlu0 %179
  %v181 = vsel %vm170, %v176, %v178
  %v182 = vsel %vm170, %v178, %v180
  %185 = vrot.lane.b32.xlu0 %v20, 110
  %v186 = vpop.permute.xlu0 %185
  %187 = vrot.lane.b32.xlu0 %v86, 110
  %v188 = vpop.permute.xlu0 %187
  %189 = vrot.lane.b32.xlu0 %v21, 110
  %v190 = vpop.permute.xlu0 %189
  %vm191 = vcmask 900096
  %v192 = vsel %vm191, %v186, %v188
  %v193 = vsel %vm191, %v188, %v190
  %196 = vrot.lane.b32.xlu0 %v22, 110
  %v197 = vpop.permute.xlu0 %196
  %198 = vrot.lane.b32.xlu0 %v89, 110
  %v199 = vpop.permute.xlu0 %198
  %200 = vrot.lane.b32.xlu0 %v23, 110
  %v201 = vpop.permute.xlu0 %200
  %v202 = vsel %vm191, %v197, %v199
  %v203 = vsel %vm191, %v199, %v201
  %v206 = vsel %vm81, %v192, 0.0
  %v207 = vsel %vm82, %v193, 0.0
  %v208 = vsel %vm83, %v202, 0.0
  %v209 = vsel %vm84, %v203, 0.0
  %210 = vrot.lane.b32.xlu0 %v20, 96
  %v211 = vpop.permute.xlu0 %210
  %212 = vrot.lane.b32.xlu0 %v86, 96
  %v213 = vpop.permute.xlu0 %212
  %214 = vrot.lane.b32.xlu0 %v21, 96
  %v215 = vpop.permute.xlu0 %214
  %vm216 = vcmask 785408
  %v217 = vsel %vm216, %v211, %v213
  %v218 = vsel %vm216, %v213, %v215
  %221 = vrot.lane.b32.xlu0 %v22, 96
  %v222 = vpop.permute.xlu0 %221
  %223 = vrot.lane.b32.xlu0 %v89, 96
  %v224 = vpop.permute.xlu0 %223
  %225 = vrot.lane.b32.xlu0 %v23, 96
  %v226 = vpop.permute.xlu0 %225
  %v227 = vsel %vm216, %v222, %v224
  %v228 = vsel %vm216, %v224, %v226
  %v231 = vsel %vm77, %v217, 0.0
  %v232 = vsel %vm78, %v218, 0.0
  %v233 = vsel %vm79, %v227, 0.0
  %v234 = vsel %vm80, %v228, 0.0
  %235 = vrot.lane.b32.xlu0 %v20, 95
  %v236 = vpop.permute.xlu0 %235
  %237 = vrot.lane.b32.xlu0 %v86, 95
  %v238 = vpop.permute.xlu0 %237
  %239 = vrot.lane.b32.xlu0 %v21, 95
  %v240 = vpop.permute.xlu0 %239
  %vm241 = vcmask 777216
  %v242 = vsel %vm241, %v236, %v238
  %v243 = vsel %vm241, %v238, %v240
  %244 = vrot.lane.b32.xlu0 %v22, 95
  %v245 = vpop.permute.xlu0 %244
  %246 = vrot.lane.b32.xlu0 %v89, 95
  %v247 = vpop.permute.xlu0 %246
  %248 = vrot.lane.b32.xlu0 %v23, 95
  %v249 = vpop.permute.xlu0 %248
  %v250 = vsel %vm241, %v245, %v247
  %v251 = vsel %vm241, %v247, %v249
  %252 = vrot.lane.b32.xlu0 %v20, 94
  %v253 = vpop.permute.xlu0 %252
  %254 = vrot.lane.b32.xlu0 %v86, 94
  %v255 = vpop.permute.xlu0 %254
  %256 = vrot.lane.b32.xlu0 %v21, 94
  %v257 = vpop.permute.xlu0 %256
  %vm258 = vcmask 769024
  %v259 = vsel %vm258, %v253, %v255
  %v260 = vsel %vm258, %v255, %v257
  %263 = vrot.lane.b32.xlu0 %v22, 94
  %v264 = vpop.permute.xlu0 %263
  %265 = vrot.lane.b32.xlu0 %v89, 94
  %v266 = vpop.permute.xlu0 %265
  %267 = vrot.lane.b32.xlu0 %v23, 94
  %v268 = vpop.permute.xlu0 %267
  %v269 = vsel %vm258, %v264, %v266
  %v270 = vsel %vm258, %v266, %v268
  %v273 = vsel %vm81, %v259, 0.0
  %v274 = vsel %vm82, %v260, 0.0
  %v275 = vsel %vm83, %v269, 0.0
  %v276 = vsel %vm84, %v270, 0.0
  %v277 = vrot.slane %v103, 4
  %v278 = vrot.slane %v104, 4
  %v279 = vrot.slane %v112, 4
  %v280 = vrot.slane %v113, 4
  %v289 = vrot.slane %v160, 4
  %v290 = vrot.slane %v161, 4
  %v291 = vrot.slane %v162, 4
  %v292 = vrot.slane %v163, 4
  %v301 = vrot.slane %v206, 4
  %v302 = vrot.slane %v207, 4
  %v303 = vrot.slane %v208, 4
  %v304 = vrot.slane %v209, 4
  %v309 = vrot.slane %v242, 4
  %v310 = vrot.slane %v243, 4
  %v311 = vrot.slane %v250, 4
  %v312 = vrot.slane %v251, 4
  %vm317 = vcmask 1043456
  %v318 = vsel %vm317, %v91, %v277
  %v319 = vsel %vm317, %v92, %v278
  %v320 = vsel %vm317, %v93, %v279
  %v321 = vsel %vm317, %v94, %v280
  %v322 = vsel %vm317, %v135, %v289
  %v323 = vsel %vm317, %v136, %v290
  %v324 = vsel %vm317, %v137, %v291
  %v325 = vsel %vm317, %v138, %v292
  %v326 = vsel %vm317, %v171, %v301
  %v327 = vsel %vm317, %v172, %v302
  %v328 = vsel %vm317, %v181, %v303
  %v329 = vsel %vm317, %v182, %v304
  %v330 = vsel %vm317, %v231, %v309
  %v331 = vsel %vm317, %v232, %v310
  %v332 = vsel %vm317, %v233, %v311
  %v333 = vsel %vm317, %v234, %v312
  %v334 = vld [vmem:[%s1] sm:$0xff]
  %v335 = vld [vmem:[%s2] sm:$0xff]
  %337 = vset.pattern.permute.xlu0 0
  %338 = vperm.xlu0 %337, %v335
  %v339 = vpop.permute.xlu0 %338
  %vm341 = vcmask 293888
  %v343 = vsel %vm341, %v334, 0
  %v346 = vsel %vm317, %v273, 0
  %v349 = vsel %vm317, %v274, 0
  %v352 = vsel %vm317, %v275, 0
  %v355 = vsel %vm317, %v276, 0
  %357 = vmatprep.subr.mxu0 0.0
  %358 = vmatpush1.msra.mxu0 0.0
  %359 = vmatprep.subr.mxu0 0.0
  %360 = vmatpush1.msra.mxu0 0.0
  %361 = vmatprep.subr.mxu0 0.0
  %362 = vmatpush1.msra.mxu0 0.0
  %363 = vmatprep.subr.mxu0 0.0
  %364 = vmatpush1.msra.mxu0 0.0
  %365 = vmatprep.subr.mxu0 0.0
  %366 = vmatpush1.msra.mxu0 0.0
  %367 = vmatprep.subr.mxu0 0.0
  %368 = vmatpush1.msra.mxu0 0.0
  %369 = vmatprep.subr.mxu0 0.0
  %370 = vmatpush1.msra.mxu0 0.0
  %371 = vmatprep.subr.mxu0 0.0
  %372 = vmatpush1.msra.mxu0 0.0
  %373 = vmatprep.subr.mxu0 0.0
  %374 = vmatpush1.msra.mxu0 0.0
  %375 = vmatprep.subr.mxu0 0.0
  %376 = vmatpush1.msra.mxu0 0.0
  %377 = vmatprep.subr.mxu0 0.0
  %378 = vmatpush1.msra.mxu0 0.0
  %379 = vmatprep.subr.mxu0 %v349
  %380 = vmatpush1.msra.mxu0 %v346
  %381 = vmatprep.subr.mxu0 %v331
  %382 = vmatpush1.msra.mxu0 %v330
  %383 = vmatprep.subr.mxu0 %v327
  %384 = vmatpush1.msra.mxu0 %v326
  %385 = vmatprep.subr.mxu0 %v323
  %386 = vmatpush1.msra.mxu0 %v322
  %387 = vmatprep.subr.mxu0 %v319
  %388 = vmatpush1.msra.mxu0 %v318
  %389 = vmatprep.subr.mxu0 0.0
  %390 = vmatpush2.msra.mxu0 0.0
  %391 = vmatprep.subr.mxu0 0.0
  %392 = vmatpush2.msra.mxu0 0.0
  %393 = vmatprep.subr.mxu0 0.0
  %394 = vmatpush2.msra.mxu0 0.0
  %395 = vmatprep.subr.mxu0 0.0
  %396 = vmatpush2.msra.mxu0 0.0
  %397 = vmatprep.subr.mxu0 0.0
  %398 = vmatpush2.msra.mxu0 0.0
  %399 = vmatprep.subr.mxu0 0.0
  %400 = vmatpush2.msra.mxu0 0.0
  %401 = vmatprep.subr.mxu0 0.0
  %402 = vmatpush2.msra.mxu0 0.0
  %403 = vmatprep.subr.mxu0 0.0
  %404 = vmatpush2.msra.mxu0 0.0
  %405 = vmatprep.subr.mxu0 0.0
  %406 = vmatpush2.msra.mxu0 0.0
  %407 = vmatprep.subr.mxu0 0.0
  %408 = vmatpush2.msra.mxu0 0.0
  %409 = vmatprep.subr.mxu0 0.0
  %410 = vmatpush2.msra.mxu0 0.0
  %411 = vmatprep.subr.mxu0 0.0
  %412 = vmatpush2.msra.mxu0 0.0
  %413 = vmatprep.subr.mxu0 0.0
  %414 = vmatpush2.msra.mxu0 0.0
  %415 = vmatprep.subr.mxu0 0.0
  %416 = vmatpush2.msra.mxu0 0.0
  %417 = vmatprep.subr.mxu0 0.0
  %418 = vmatpush2.msra.mxu0 0.0
  %419 = vmatprep.subr.mxu0 0.0
  %420 = vmatpush2.msra.mxu0 0.0
  %421 = vmatprep.mubr.f32.mxu0 0.0
  %422 = vmatmul.mubr.f32.gmra.mxu0 %v343
  %v423 = vpop.f32.mrf.mxu0
  %v424 = vadd.f32 %v339, %v423
  %v425 = vpop.f32.mrf.mxu0
  %v426 = vadd.f32 %v339, %v425
  %427 = vdwg.mxu0
  %428 = vmatprep.subr.mxu0 0.0
  %429 = vmatpush1.msra.mxu0 0.0
  %430 = vmatprep.subr.mxu0 0.0
  %431 = vmatpush1.msra.mxu0 0.0
  %432 = vmatprep.subr.mxu0 0.0
  %433 = vmatpush1.msra.mxu0 0.0
  %434 = vmatprep.subr.mxu0 0.0
  %435 = vmatpush1.msra.mxu0 0.0
  %436 = vmatprep.subr.mxu0 0.0
  %437 = vmatpush1.msra.mxu0 0.0
  %438 = vmatprep.subr.mxu0 0.0
  %439 = vmatpush1.msra.mxu0 0.0
  %440 = vmatprep.subr.mxu0 0.0
  %441 = vmatpush1.msra.mxu0 0.0
  %442 = vmatprep.subr.mxu0 0.0
  %443 = vmatpush1.msra.mxu0 0.0
  %444 = vmatprep.subr.mxu0 0.0
  %445 = vmatpush1.msra.mxu0 0.0
  %446 = vmatprep.subr.mxu0 0.0
  %447 = vmatpush1.msra.mxu0 0.0
  %448 = vmatprep.subr.mxu0 0.0
  %449 = vmatpush1.msra.mxu0 0.0
  %450 = vmatprep.subr.mxu0 %v355
  %451 = vmatpush1.msra.mxu0 %v352
  %452 = vmatprep.subr.mxu0 %v333
  %453 = vmatpush1.msra.mxu0 %v332
  %454 = vmatprep.subr.mxu0 %v329
  %455 = vmatpush1.msra.mxu0 %v328
  %456 = vmatprep.subr.mxu0 %v325
  %457 = vmatpush1.msra.mxu0 %v324
  %458 = vmatprep.subr.mxu0 %v321
  %459 = vmatpush1.msra.mxu0 %v320
  %460 = vmatprep.subr.mxu0 0.0
  %461 = vmatpush2.msra.mxu0 0.0
  %462 = vmatprep.subr.mxu0 0.0
  %463 = vmatpush2.msra.mxu0 0.0
  %464 = vmatprep.subr.mxu0 0.0
  %465 = vmatpush2.msra.mxu0 0.0
  %466 = vmatprep.subr.mxu0 0.0
  %467 = vmatpush2.msra.mxu0 0.0
  %468 = vmatprep.subr.mxu0 0.0
  %469 = vmatpush2.msra.mxu0 0.0
  %470 = vmatprep.subr.mxu0 0.0
  %471 = vmatpush2.msra.mxu0 0.0
  %472 = vmatprep.subr.mxu0 0.0
  %473 = vmatpush2.msra.mxu0 0.0
  %474 = vmatprep.subr.mxu0 0.0
  %475 = vmatpush2.msra.mxu0 0.0
  %476 = vmatprep.subr.mxu0 0.0
  %477 = vmatpush2.msra.mxu0 0.0
  %478 = vmatprep.subr.mxu0 0.0
  %479 = vmatpush2.msra.mxu0 0.0
  %480 = vmatprep.subr.mxu0 0.0
  %481 = vmatpush2.msra.mxu0 0.0
  %482 = vmatprep.subr.mxu0 0.0
  %483 = vmatpush2.msra.mxu0 0.0
  %484 = vmatprep.subr.mxu0 0.0
  %485 = vmatpush2.msra.mxu0 0.0
  %486 = vmatprep.subr.mxu0 0.0
  %487 = vmatpush2.msra.mxu0 0.0
  %488 = vmatprep.subr.mxu0 0.0
  %489 = vmatpush2.msra.mxu0 0.0
  %490 = vmatprep.subr.mxu0 0.0
  %491 = vmatpush2.msra.mxu0 0.0
  %492 = vmatprep.mubr.f32.mxu0 0.0
  %493 = vmatmul.mubr.f32.gmra.mxu0 %v343
  %v494 = vpop.f32.mrf.mxu0
  %v495 = vadd.f32 %v339, %v494
  %v496 = vpop.f32.mrf.mxu0
  %v497 = vadd.f32 %v339, %v496
  %498 = vdwg.mxu0
  %v499 = vmax.f32 %v424, 0.0
  %v500 = vmax.f32 %v426, 0.0
  %v501 = vmax.f32 %v495, 0.0
  %v502 = vmax.f32 %v497, 0.0
  %v503 = vld [vmem:[%s3] sm:$0xff]
  %vm504 = vcmask 31744
  %v506 = vsel %vm504, %v503, 0
  %v508 = vsel %vm317, %v171, 0
  %v510 = vsel %vm317, %v172, 0
  %v512 = vsel %vm317, %v181, 0
  %v514 = vsel %vm317, %v182, 0
  %516 = vmatprep.subr.mxu0 0.0
  %517 = vmatpush1.msra.mxu0 0.0
  %518 = vmatprep.subr.mxu0 0.0
  %519 = vmatpush1.msra.mxu0 0.0
  %520 = vmatprep.subr.mxu0 0.0
  %521 = vmatpush1.msra.mxu0 0.0
  %522 = vmatprep.subr.mxu0 0.0
  %523 = vmatpush1.msra.mxu0 0.0
  %524 = vmatprep.subr.mxu0 0.0
  %525 = vmatpush1.msra.mxu0 0.0
  %526 = vmatprep.subr.mxu0 0.0
  %527 = vmatpush1.msra.mxu0 0.0
  %528 = vmatprep.subr.mxu0 0.0
  %529 = vmatpush1.msra.mxu0 0.0
  %530 = vmatprep.subr.mxu0 0.0
  %531 = vmatpush1.msra.mxu0 0.0
  %532 = vmatprep.subr.mxu0 0.0
  %533 = vmatpush1.msra.mxu0 0.0
  %534 = vmatprep.subr.mxu0 0.0
  %535 = vmatpush1.msra.mxu0 0.0
  %536 = vmatprep.subr.mxu0 0.0
  %537 = vmatpush1.msra.mxu0 0.0
  %538 = vmatprep.subr.mxu0 0.0
  %539 = vmatpush1.msra.mxu0 0.0
  %540 = vmatprep.subr.mxu0 0.0
  %541 = vmatpush1.msra.mxu0 0.0
  %542 = vmatprep.subr.mxu0 0.0
  %543 = vmatpush1.msra.mxu0 0.0
  %544 = vmatprep.subr.mxu0 0.0
  %545 = vmatpush1.msra.mxu0 0.0
  %546 = vmatprep.subr.mxu0 %v510
  %547 = vmatpush1.msra.mxu0 %v508
  %548 = vmatprep.subr.mxu0 0.0
  %549 = vmatpush2.msra.mxu0 0.0
  %550 = vmatprep.subr.mxu0 0.0
  %551 = vmatpush2.msra.mxu0 0.0
  %552 = vmatprep.subr.mxu0 0.0
  %553 = vmatpush2.msra.mxu0 0.0
  %554 = vmatprep.subr.mxu0 0.0
  %555 = vmatpush2.msra.mxu0 0.0
  %556 = vmatprep.subr.mxu0 0.0
  %557 = vmatpush2.msra.mxu0 0.0
  %558 = vmatprep.subr.mxu0 0.0
  %559 = vmatpush2.msra.mxu0 0.0
  %560 = vmatprep.subr.mxu0 0.0
  %561 = vmatpush2.msra.mxu0 0.0
  %562 = vmatprep.subr.mxu0 0.0
  %563 = vmatpush2.msra.mxu0 0.0
  %564 = vmatprep.subr.mxu0 0.0
  %565 = vmatpush2.msra.mxu0 0.0
  %566 = vmatprep.subr.mxu0 0.0
  %567 = vmatpush2.msra.mxu0 0.0
  %568 = vmatprep.subr.mxu0 0.0
  %569 = vmatpush2.msra.mxu0 0.0
  %570 = vmatprep.subr.mxu0 0.0
  %571 = vmatpush2.msra.mxu0 0.0
  %572 = vmatprep.subr.mxu0 0.0
  %573 = vmatpush2.msra.mxu0 0.0
  %574 = vmatprep.subr.mxu0 0.0
  %575 = vmatpush2.msra.mxu0 0.0
  %576 = vmatprep.subr.mxu0 0.0
  %577 = vmatpush2.msra.mxu0 0.0
  %578 = vmatprep.subr.mxu0 0.0
  %579 = vmatpush2.msra.mxu0 0.0
  %580 = vmatprep.mubr.f32.mxu0 0.0
  %581 = vmatmul.mubr.f32.gmra.mxu0 %v506
  %v582 = vpop.f32.mrf.mxu0
  %v583 = vadd.f32 0.0, %v582
  %v584 = vpop.f32.mrf.mxu0
  %v585 = vadd.f32 0.0, %v584
  %586 = vdwg.mxu0
  %587 = vmatprep.subr.mxu0 0.0
  %588 = vmatpush1.msra.mxu0 0.0
  %589 = vmatprep.subr.mxu0 0.0
  %590 = vmatpush1.msra.mxu0 0.0
  %591 = vmatprep.subr.mxu0 0.0
  %592 = vmatpush1.msra.mxu0 0.0
  %593 = vmatprep.subr.mxu0 0.0
  %594 = vmatpush1.msra.mxu0 0.0
  %595 = vmatprep.subr.mxu0 0.0
  %596 = vmatpush1.msra.mxu0 0.0
  %597 = vmatprep.subr.mxu0 0.0
  %598 = vmatpush1.msra.mxu0 0.0
  %599 = vmatprep.subr.mxu0 0.0
  %600 = vmatpush1.msra.mxu0 0.0
  %601 = vmatprep.subr.mxu0 0.0
  %602 = vmatpush1.msra.mxu0 0.0
  %603 = vmatprep.subr.mxu0 0.0
  %604 = vmatpush1.msra.mxu0 0.0
  %605 = vmatprep.subr.mxu0 0.0
  %606 = vmatpush1.msra.mxu0 0.0
  %607 = vmatprep.subr.mxu0 0.0
  %608 = vmatpush1.msra.mxu0 0.0
  %609 = vmatprep.subr.mxu0 0.0
  %610 = vmatpush1.msra.mxu0 0.0
  %611 = vmatprep.subr.mxu0 0.0
  %612 = vmatpush1.msra.mxu0 0.0
  %613 = vmatprep.subr.mxu0 0.0
  %614 = vmatpush1.msra.mxu0 0.0
  %615 = vmatprep.subr.mxu0 0.0
  %616 = vmatpush1.msra.mxu0 0.0
  %617 = vmatprep.subr.mxu0 %v514
  %618 = vmatpush1.msra.mxu0 %v512
  %619 = vmatprep.subr.mxu0 0.0
  %620 = vmatpush2.msra.mxu0 0.0
  %621 = vmatprep.subr.mxu0 0.0
  %622 = vmatpush2.msra.mxu0 0.0
  %623 = vmatprep.subr.mxu0 0.0
  %624 = vmatpush2.msra.mxu0 0.0
  %625 = vmatprep.subr.mxu0 0.0
  %626 = vmatpush2.msra.mxu0 0.0
  %627 = vmatprep.subr.mxu0 0.0
  %628 = vmatpush2.msra.mxu0 0.0
  %629 = vmatprep.subr.mxu0 0.0
  %630 = vmatpush2.msra.mxu0 0.0
  %631 = vmatprep.subr.mxu0 0.0
  %632 = vmatpush2.msra.mxu0 0.0
  %633 = vmatprep.subr.mxu0 0.0
  %634 = vmatpush2.msra.mxu0 0.0
  %635 = vmatprep.subr.mxu0 0.0
  %636 = vmatpush2.msra.mxu0 0.0
  %637 = vmatprep.subr.mxu0 0.0
  %638 = vmatpush2.msra.mxu0 0.0
  %639 = vmatprep.subr.mxu0 0.0
  %640 = vmatpush2.msra.mxu0 0.0
  %641 = vmatprep.subr.mxu0 0.0
  %642 = vmatpush2.msra.mxu0 0.0
  %643 = vmatprep.subr.mxu0 0.0
  %644 = vmatpush2.msra.mxu0 0.0
  %645 = vmatprep.subr.mxu0 0.0
  %646 = vmatpush2.msra.mxu0 0.0
  %647 = vmatprep.subr.mxu0 0.0
  %648 = vmatpush2.msra.mxu0 0.0
  %649 = vmatprep.subr.mxu0 0.0
  %650 = vmatpush2.msra.mxu0 0.0
  %651 = vmatprep.mubr.f32.mxu0 0.0
  %652 = vmatmul.mubr.f32.gmra.mxu0 %v506
  %v653 = vpop.f32.mrf.mxu0
  %v654 = vadd.f32 0.0, %v653
  %v655 = vpop.f32.mrf.mxu0
  %v656 = vadd.f32 0.0, %v655
  %657 = vdwg.mxu0
  %v658 = vadd.f32 %v499, %v583
  %v659 = vadd.f32 %v500, %v585
  %v660 = vadd.f32 %v501, %v654
  %v661 = vadd.f32 %v502, %v656
  %v662 = vld [vmem:[%s4] sm:$0xff]
  %664 = vset.pattern.permute.xlu0 0
  %665 = vperm.xlu0 %664, %v662
  %v666 = vpop.permute.xlu0 %665
  %v668 = vadd.f32 %v658, %v666
  %v669 = vadd.f32 %v659, %v666
  %v670 = vadd.f32 %v660, %v666
  %v671 = vadd.f32 %v661, %v666
  %672 = vst [vmem:[%s5] sm:$0xff] %v668
  %673 = vst [vmem:[%s5 + $0x8] sm:$0xff] %v669
  %s674 = scalar_lea.vmem %s5, 16
  %675 = vst [vmem:[%s674] sm:$0xff] %v670
  %676 = vst [vmem:[%s674 + $0x8] sm:$0xff] %v671
  // Predicated region
  $region22: #{residual_add_forward.1} parent=0 // pred_check
    _
  $region23: #{residual_add_forward.1} parent=0 // pred_check_branch
    %678 = sbr.rel (0) target = $region25
  $region24: #{residual_add_forward.1} parent=0 // pred_region
    _
  $region25: #{residual_add_forward.1} parent=0 // pred_fallthru
    _
  // Predicated region
  $region26: #{residual_add_forward.1} parent=0 // pred_check
    _
  $region27: #{residual_add_forward.1} parent=0 // pred_check_branch
    %680 = sbr.rel (0) target = $region29
  $region28: #{residual_add_forward.1} parent=0 // pred_region
    _
  $region29: #{residual_add_forward.1} parent=0 // pred_fallthru
    _

</llo_original>
